<compile_context>
chip_gen: v6e
topology: v6e:2x2x1
jax: 0.10.0
libtpu: 0.0.40
codegen_flags: <defaults>
</compile_context>

<pallas_src>
import functools

import jax
import jax.numpy as jnp
from jax import lax
from jax.experimental import pallas as pl
from jax.experimental.pallas import tpu as pltpu


def _fedta_kernel(x_ref, w_ref, anchor_ref, out_ref, acc_ref):
    """One K-tile of the feature projection; last tile normalizes + hits anchors."""
    k = pl.program_id(0)

    @pl.when(k == 0)
    def _init():
        acc_ref[...] = jnp.zeros_like(acc_ref)

    # x streams in as f32 and is cast to bf16 in-kernel (no separate XLA cast
    # pass over x in HBM); w tiles are frozen bf16.  f32 accumulation on MXU.
    x_bf16 = x_ref[...].astype(jnp.bfloat16)
    acc_ref[...] += jnp.dot(x_bf16, w_ref[...], preferred_element_type=jnp.float32)

    @pl.when(k == pl.num_programs(0) - 1)
    def _finalize():
        feats = acc_ref[...]                                   # (B, F) f32
        # F.normalize(p=2, dim=1): clamp ||f|| at 1e-12  <=>  clamp ||f||^2 at 1e-24.
        sq = jnp.sum(feats * feats, axis=-1, keepdims=True)
        inv = lax.rsqrt(jnp.maximum(sq, 1e-24))                # single EUP op
        feats_n = (feats * inv).astype(anchor_ref.dtype)       # bf16 for the MXU
        # Anchors are pre-transposed to (F, C) at init (frozen), so this is a
        # plain K x N contraction — no in-kernel transpose.
        out_ref[...] = jnp.dot(
            feats_n, anchor_ref[...], preferred_element_type=jnp.float32)


def _round_up(x, m):
    return ((x + m - 1) // m) * m


def _vmem_capacity_bytes():
    """Physical VMEM per TensorCore (v5e/v6e: 128 MiB, v7x: 64 MiB)."""
    try:
        return int(pltpu.get_tpu_info().vmem_capacity_bytes)
    except Exception:
        return 64 * 1024 * 1024   # conservative fallback (v7x-sized)


def _pick_k_tile(d_in, batch, feature_dim, num_classes, *, max_tile=8192):
    """Size the K tile from a per-generation VMEM budget.

    Budget = 70% of physical VMEM (~90 MiB on v5e/v6e, ~45 MiB on v7x).  We
    subtract resident buffers (double-buffered anchors, f32 accumulator,
    double-buffered output tile) and spend the rest on the double-buffered
    x (f32) and w (bf16) K tiles.  Returns (tk, vmem_limit_bytes).
    """
    budget = int(_vmem_capacity_bytes() * 0.70)
    fixed = (2 * feature_dim * num_classes * 2      # anchors bf16, 2 buffers
             + batch * feature_dim * 4              # f32 accumulator scratch
             + 2 * batch * num_classes * 4)         # f32 output tile, 2 buffers
    per_tk = 2 * batch * 4 + 2 * feature_dim * 2    # x (f32) + w (bf16), double-buffered
    avail = max(budget - fixed, 0)
    tk = (avail // per_tk) // 128 * 128
    tk = min(tk, max_tile, _round_up(d_in, 128))
    tk = max(tk, 128)
    return tk, budget


@functools.partial(jax.jit, static_argnames=("tk", "vmem_limit"))
def _fedta_forward_impl(x_nchw, w_feat, anchor_points_t, *, tk, vmem_limit):
    B = x_nchw.shape[0]
    d_in = x_nchw.shape[1] * x_nchw.shape[2] * x_nchw.shape[3]
    feature_dim = w_feat.shape[1]
    num_classes = anchor_points_t.shape[1]

    # Row-major flatten (matches torch .view); stays f32 — the bf16 cast is
    # fused into the kernel so x is only read once from HBM.
    x_flat = x_nchw.reshape(B, d_in)

    # Zero-pad the contraction dim to a multiple of tk (numerically exact:
    # zero rows contribute nothing).  No-op at the demo shapes; for a real
    # ViT-sized d_in, pad the frozen w_feat once at init instead.
    d_pad = _round_up(d_in, tk)
    if d_pad != d_in:
        x_flat = jnp.pad(x_flat, ((0, 0), (0, d_pad - d_in)))
        w_feat = jnp.pad(w_feat, ((0, d_pad - d_in), (0, 0)))
    nk = d_pad // tk

    cost = pl.CostEstimate(
        flops=2 * B * d_pad * feature_dim + 2 * B * feature_dim * num_classes,
        transcendentals=B,  # one rsqrt per row
        bytes_accessed=int(x_flat.size * 4 + w_feat.size * 2
                           + anchor_points_t.size * 2 + B * num_classes * 4),
    )

    # Note: on v7x the K reduction could additionally be split across the two
    # TensorCores (parallel grid axis + cross-core combine) for ~2x on this
    # HBM-bound kernel; kept single-path here for portability.
    return pl.pallas_call(
        _fedta_kernel,
        out_shape=jax.ShapeDtypeStruct((B, num_classes), jnp.float32),
        grid_spec=pltpu.PrefetchScalarGridSpec(
            num_scalar_prefetch=0,
            grid=(nk,),
            in_specs=[
                pl.BlockSpec((B, tk), lambda k: (0, k)),                      # x tile (f32)
                pl.BlockSpec((tk, feature_dim), lambda k: (k, 0)),            # w tile (bf16)
                pl.BlockSpec((feature_dim, num_classes), lambda k: (0, 0)),   # anchors^T (resident)
            ],
            out_specs=pl.BlockSpec((B, num_classes), lambda k: (0, 0)),       # resident output
            scratch_shapes=[pltpu.VMEM((B, feature_dim), jnp.float32)],       # f32 accumulator
        ),
        compiler_params=pltpu.CompilerParams(
            dimension_semantics=("arbitrary",),   # K is a reduction axis
            vmem_limit_bytes=vmem_limit,          # per-generation scoped limit
        ),
        cost_estimate=cost,
    )(x_flat, w_feat, anchor_points_t)


def fedta_forward(x_nchw, w_feat, anchor_points_t):
    """x_nchw: (B,C,H,W) f32; w_feat: (d_in,F) bf16; anchor_points_t: (F,C) bf16."""
    B = x_nchw.shape[0]
    d_in = x_nchw.shape[1] * x_nchw.shape[2] * x_nchw.shape[3]
    feature_dim = w_feat.shape[1]
    num_classes = anchor_points_t.shape[1]
    tk, vmem_limit = _pick_k_tile(d_in, B, feature_dim, num_classes)
    return _fedta_forward_impl(x_nchw, w_feat, anchor_points_t,
                               tk=tk, vmem_limit=vmem_limit)


def init_params(key, d_in, feature_dim, num_classes):
    k_w, k_anchor = jax.random.split(key)
    # Frozen feature-extractor stand-in weights, stored bf16 (frozen -> cast once).
    # TODO(synk): the real ViTBackbone ('vit_tiny', pretrained) is external to the
    # reference module; only the AdaptiveTailAnchor tail is reproduced exactly.
    w_feat = (jax.random.normal(k_w, (d_in, feature_dim), jnp.float32) * 0.02
              ).astype(jnp.bfloat16)
    # AdaptiveTailAnchor.anchor_points = F.normalize(randn(C, F), p=2, dim=1),
    # pre-transposed once (frozen param) to (F, C) so the in-kernel anchor
    # matmul is a plain K x N contraction.
    a = jax.random.normal(k_anchor, (num_classes, feature_dim), jnp.float32)
    a = a / jnp.maximum(jnp.linalg.norm(a, axis=1, keepdims=True), 1e-12)
    anchor_points_t = a.T.astype(jnp.bfloat16)
    return w_feat, anchor_points_t


if __name__ == "__main__":
    # Small shapes consistent with the forward:
    #   x: (B=8, C=3, H=16, W=16) -> d_in = 768 ; feature_dim = 256 ; classes = 128
    B, C, H, W = 8, 3, 16, 16
    feature_dim, num_classes = 256, 128
    d_in = C * H * W

    key = jax.random.PRNGKey(0)
    k_x, k_params = jax.random.split(key)
    x = jax.random.normal(k_x, (B, C, H, W), jnp.float32)
    w_feat, anchor_points_t = init_params(k_params, d_in, feature_dim, num_classes)

    logits = fedta_forward(x, w_feat, anchor_points_t)
    jax.block_until_ready(logits)
    assert logits.shape == (B, num_classes)
    assert logits.dtype == jnp.float32

    # Tight check: pure-JAX reference on the same bf16-quantized operands
    # (frozen weights/anchors really are stored bf16; x is cast bf16 in-kernel).
    x_q = x.reshape(B, d_in).astype(jnp.bfloat16).astype(jnp.float32)
    w_q = w_feat.astype(jnp.float32)
    a_q = anchor_points_t.astype(jnp.float32)
    feats_ref = x_q @ w_q
    feats_ref = feats_ref * lax.rsqrt(
        jnp.maximum(jnp.sum(feats_ref * feats_ref, axis=1, keepdims=True), 1e-24))
    feats_ref = feats_ref.astype(jnp.bfloat16).astype(jnp.float32)
    logits_ref = feats_ref @ a_q
    assert jnp.allclose(logits, logits_ref, atol=5e-3, rtol=5e-3), (
        float(jnp.max(jnp.abs(logits - logits_ref))))

    # Loose sanity check against the full-f32 forward (only bf16 quantization of
    # x / frozen params separates the two; logits are cosine similarities in [-1,1]).
    feats32 = x.reshape(B, d_in) @ w_feat.astype(jnp.float32)
    feats32 = feats32 / jnp.maximum(
        jnp.linalg.norm(feats32, axis=1, keepdims=True), 1e-12)
    logits32 = feats32 @ anchor_points_t.astype(jnp.float32)
    assert float(jnp.max(jnp.abs(logits - logits32))) < 0.05

    print("KERNEL_OK")
</pallas_src>

<mosaic_0001>
module attributes {stable_mosaic.version = 11 : i64} {
  func.func @_fedta_kernel(%arg0: i32, %arg1: memref<8x768xf32, #tpu.memory_space<vmem>>, %arg2: memref<768x256xbf16, #tpu.memory_space<vmem>>, %arg3: memref<256x128xbf16, #tpu.memory_space<vmem>>, %arg4: memref<8x128xf32, #tpu.memory_space<vmem>>, %arg5: memref<8x256xf32, #tpu.memory_space<vmem>>) attributes {dimension_semantics = [#tpu.dimension_semantics<arbitrary>], iteration_bounds = array<i64: 1>, scalar_prefetch = 0 : i64, scratch_operands = 1 : i64, tpu.core_type = #tpu.core_type<tc>, window_params = [{transform_indices = @transform_0, window_bounds = array<i64: 8, 768>}, {transform_indices = @transform_1, window_bounds = array<i64: 768, 256>}, {pipeline_mode = #tpu.pipeline_mode<synchronous>, transform_indices = @transform_2, window_bounds = array<i64: 256, 128>}, {pipeline_mode = #tpu.pipeline_mode<synchronous>, transform_indices = @transform_3, window_bounds = array<i64: 8, 128>}]} {
    %c0_i32 = arith.constant 0 : i32
    %0 = arith.cmpi eq, %arg0, %c0_i32 : i32
    %1 = arith.extui %0 : i1 to i32
    %c0_i32_0 = arith.constant 0 : i32
    %2 = arith.cmpi ne, %1, %c0_i32_0 : i32
    scf.if %2 {
      %cst_10 = arith.constant 0.000000e+00 : f32
      %13 = vector.broadcast %cst_10 : f32 to vector<8x256xf32>
      %c0_11 = arith.constant 0 : index
      %c0_12 = arith.constant 0 : index
      %14 = vector.load %arg5[%c0_11, %c0_12] : memref<8x256xf32, #tpu.memory_space<vmem>>, vector<8x256xf32>
      tpu.vector_store %arg5[%c0_11, %c0_12], %13 {strides = array<i32>} : memref<8x256xf32, #tpu.memory_space<vmem>>, vector<8x256xf32>,
    } else {
    }
    %c0 = arith.constant 0 : index
    %c0_1 = arith.constant 0 : index
    %3 = vector.load %arg1[%c0, %c0_1] : memref<8x768xf32, #tpu.memory_space<vmem>>, vector<8x768xf32>
    %4 = arith.truncf %3 : vector<8x768xf32> to vector<8x768xbf16>
    %c0_2 = arith.constant 0 : index
    %c0_3 = arith.constant 0 : index
    %5 = vector.load %arg5[%c0_2, %c0_3] : memref<8x256xf32, #tpu.memory_space<vmem>>, vector<8x256xf32>
    %c0_4 = arith.constant 0 : index
    %c0_5 = arith.constant 0 : index
    %6 = vector.load %arg2[%c0_4, %c0_5] : memref<768x256xbf16, #tpu.memory_space<vmem>>, vector<768x256xbf16>
    %cst = arith.constant dense<0.000000e+00> : vector<8x256xf32>
    %7 = tpu.matmul %4, %6, %cst {dimension_numbers = #tpu.dot_dimension_numbers<[1], [0], [0], [1], [0, 0, 1, 1], [], []>} : vector<8x768xbf16>, vector<768x256xbf16>, vector<8x256xf32> -> vector<8x256xf32>
    %8 = arith.addf %5, %7 : vector<8x256xf32>
    %c0_6 = arith.constant 0 : index
    %c0_7 = arith.constant 0 : index
    %9 = vector.load %arg5[%c0_6, %c0_7] : memref<8x256xf32, #tpu.memory_space<vmem>>, vector<8x256xf32>
    tpu.vector_store %arg5[%c0_6, %c0_7], %8 {strides = array<i32>} : memref<8x256xf32, #tpu.memory_space<vmem>>, vector<8x256xf32>,
    %c0_i32_8 = arith.constant 0 : i32
    %10 = arith.cmpi eq, %arg0, %c0_i32_8 : i32
    %11 = arith.extui %10 : i1 to i32
    %c0_i32_9 = arith.constant 0 : i32
    %12 = arith.cmpi ne, %11, %c0_i32_9 : i32
    scf.if %12 {
      %c0_10 = arith.constant 0 : index
      %c0_11 = arith.constant 0 : index
      %13 = vector.load %arg5[%c0_10, %c0_11] : memref<8x256xf32, #tpu.memory_space<vmem>>, vector<8x256xf32>
      %14 = arith.mulf %13, %13 : vector<8x256xf32>
      %cst_12 = arith.constant dense<0.000000e+00> : vector<8xf32>
      %15 = vector.multi_reduction <add>, %14, %cst_12 [1] : vector<8x256xf32> to vector<8xf32>
      %16 = vector.shape_cast %15 : vector<8xf32> to vector<8x1xf32>
      %cst_13 = arith.constant 1.000000e-24 : f32
      %17 = vector.broadcast %cst_13 : f32 to vector<8x1xf32>
      %18 = arith.maximumf %16, %17 : vector<8x1xf32>
      %19 = math.rsqrt %18 : vector<8x1xf32>
      %20 = vector.broadcast %19 : vector<8x1xf32> to vector<8x256xf32>
      %21 = arith.mulf %13, %20 : vector<8x256xf32>
      %22 = arith.truncf %21 : vector<8x256xf32> to vector<8x256xbf16>
      %c0_14 = arith.constant 0 : index
      %c0_15 = arith.constant 0 : index
      %23 = vector.load %arg3[%c0_14, %c0_15] : memref<256x128xbf16, #tpu.memory_space<vmem>>, vector<256x128xbf16>
      %cst_16 = arith.constant dense<0.000000e+00> : vector<8x128xf32>
      %24 = tpu.matmul %22, %23, %cst_16 {dimension_numbers = #tpu.dot_dimension_numbers<[1], [0], [0], [1], [0, 0, 1, 1], [], []>} : vector<8x256xbf16>, vector<256x128xbf16>, vector<8x128xf32> -> vector<8x128xf32>
      %c0_17 = arith.constant 0 : index
      %c0_18 = arith.constant 0 : index
      %25 = vector.load %arg4[%c0_17, %c0_18] : memref<8x128xf32, #tpu.memory_space<vmem>>, vector<8x128xf32>
      tpu.vector_store %arg4[%c0_17, %c0_18], %24 {strides = array<i32>} : memref<8x128xf32, #tpu.memory_space<vmem>>, vector<8x128xf32>,
    } else {
    }
    return
  }
  func.func @transform_0(%arg0: i32) -> (i32, i32) {
    %c0_i32 = arith.constant 0 : i32
    %c0_i32_0 = arith.constant 0 : i32
    return %c0_i32, %arg0 : i32, i32
  }
  func.func @transform_1(%arg0: i32) -> (i32, i32) {
    %c0_i32 = arith.constant 0 : i32
    %c0_i32_0 = arith.constant 0 : i32
    return %arg0, %c0_i32 : i32, i32
  }
  func.func @transform_2(%arg0: i32) -> (i32, i32) {
    %c0_i32 = arith.constant 0 : i32
    %c0_i32_0 = arith.constant 0 : i32
    %c0_i32_1 = arith.constant 0 : i32
    return %c0_i32, %c0_i32_0 : i32, i32
  }
  func.func @transform_3(%arg0: i32) -> (i32, i32) {
    %c0_i32 = arith.constant 0 : i32
    %c0_i32_0 = arith.constant 0 : i32
    %c0_i32_1 = arith.constant 0 : i32
    return %c0_i32, %c0_i32_0 : i32, i32
  }
}

</mosaic_0001>

<llo_original>
// kernel: _fedta_forward_impl.1
$region0: #{_fedta_forward_impl.1}
  #allocation0 [shape = 'u32[]', space=smem, size = 0x4, offset = 0x4, fixed_abs, tag = 'smem constant byte address 0x4 - core index']
  #allocation1 [shape = 'u32[144,128]{1,0:T(1,128)}', space=vmem, size = 0x12000, scoped, tag = 'internal scratch']
  #allocation2 [shape = 'f32[8,256]{1,0:T(8,128)}', space=vmem, size = 0x2000, scoped, tag = 'scratch operand']
  %s0 = inlined_call_operand.vmem [shape: f32[8,768], index: 0, kind: input, shape index: {}]
  %s1 = inlined_call_operand.hbm [shape: bf16[768,256], index: 1, kind: input, shape index: {}]
  %s2 = inlined_call_operand.vmem [shape: bf16[256,128], index: 2, kind: input, shape index: {}]
  %s3 = inlined_call_operand.hbm [shape: f32[8,128], index: 3, kind: output, shape index: {}]
  %s4 = sld [smem:[#allocation0]]
  $region34: #{_fedta_forward_impl.1} parent=0
    _
  %s6 = ssub.s32 1, %s4
  %s7 = scalar_select 0, %s6, %s4
  $region1: #{_fedta_forward_impl.1} parent=0
    #allocation3 [shape = 'u8[393216]{0}', space=vmem, size = 0x60000, scoped, tag = 'input window, operand 1, single buffered']
    #allocation4 [shape = 's32[1]{0}', space=sflag, size = 0x4, scoped, tag = 'scoped memory for _fedta_forward_impl.1']
    #allocation5 [shape = 's32[1]{0}', space=sflag, size = 0x4, scoped, tag = 'scoped memory for _fedta_forward_impl.1']
    #allocation6 [shape = 'u8[4096]{0}', space=vmem, size = 0x1000, scoped, tag = 'output window, operand 0, single buffered']
    %8 = vsyncpa [#allocation4], 0
    %9 = vsyncpa [#allocation5], 0
    // Predicated region
    $region2: #{_fedta_forward_impl.1} parent=1 // pred_check
      _
    $region3: #{_fedta_forward_impl.1} parent=1 // pred_check_branch
      %11 = sbr.rel (0) target = $region5
    $region4: #{_fedta_forward_impl.1} parent=1 // pred_region
      _
    $region5: #{_fedta_forward_impl.1} parent=1 // pred_fallthru
      _
    // Predicated region
    $region6: #{_fedta_forward_impl.1} parent=1 // pred_check
      _
    $region7: #{_fedta_forward_impl.1} parent=1 // pred_check_branch
      %13 = sbr.rel (0) target = $region9
    $region8: #{_fedta_forward_impl.1} parent=1 // pred_region
      %s15 = ssub.s32 12288, 12288
      %16 = vsyncadd [#allocation4], %s15
      %s17 = sshll.u32 [#allocation3], 4
      %s18 = int_to_ptr.vmem [resolvable:$true] %s17
      %23 = dma.hbm_to_vmem [thread:$0]  %s1, 12288, %s18, [#allocation4], 128, 128, 8
    $region9: #{_fedta_forward_impl.1} parent=1 // pred_fallthru
      _
    // Predicated region
    $region10: #{_fedta_forward_impl.1} parent=1 // pred_check
      _
    $region11: #{_fedta_forward_impl.1} parent=1 // pred_check_branch
      %25 = sbr.rel (0) target = $region13
    $region12: #{_fedta_forward_impl.1} parent=1 // pred_region
      _
    $region13: #{_fedta_forward_impl.1} parent=1 // pred_fallthru
      _
    // Predicated region
    $region14: #{_fedta_forward_impl.1} parent=1 // pred_check
      _
    $region15: #{_fedta_forward_impl.1} parent=1 // pred_check_branch
      %27 = sbr.rel (0) target = $region17
    $region16: #{_fedta_forward_impl.1} parent=1 // pred_region
      %28 = dma.done [#allocation4], 12288
    $region17: #{_fedta_forward_impl.1} parent=1 // pred_fallthru
      _
    %p30 = scmp.eq.s32.totalorder 0, 0
    // Predicated region
    $region18: #{_fedta_forward_impl.1} parent=1 // pred_check
      %p31 = pneg %p30
    $region19: #{_fedta_forward_impl.1} parent=1 // pred_check_branch
      %33 = sbr.rel (%p31) target = $region21
    $region20: #{_fedta_forward_impl.1} parent=1 // pred_region
      %34 = vst [vmem:[#allocation2] sm:$0xff] 0.0
      %35 = vst [vmem:[#allocation2 + $0x8] sm:$0xff] 0.0
    $region21: #{_fedta_forward_impl.1} parent=1 // pred_fallthru
      _
    %v36 = vld [vmem:[%s0] sm:$0xff]
    %v37 = vld [vmem:[%s0 + $0x8] sm:$0xff]
    %v38 = vld [vmem:[%s0 + $0x10] sm:$0xff]
    %v39 = vld [vmem:[%s0 + $0x18] sm:$0xff]
    %v40 = vld [vmem:[%s0 + $0x20] sm:$0xff]
    %v41 = vld [vmem:[%s0 + $0x28] sm:$0xff]
    %v42 = vpack.c.bf16 %v36, %v36
    %v43 = vpack.c.bf16 %v37, %v37
    %v44 = vpack.c.bf16 %v38, %v38
    %v45 = vpack.c.bf16 %v39, %v39
    %v46 = vpack.c.bf16 %v40, %v40
    %v47 = vpack.c.bf16 %v41, %v41
    %v48 = vld [vmem:[#allocation2] sm:$0xff]
    %v49 = vld [vmem:[#allocation2 + $0x8] sm:$0xff]
    %v50 = vld [vmem:[#allocation3] sm:$0xff]
    %v51 = vld [vmem:[#allocation3 + $0x8] sm:$0xff]
    %v52 = vld [vmem:[#allocation3 + $0x10] sm:$0xff]
    %v53 = vld [vmem:[#allocation3 + $0x18] sm:$0xff]
    %v54 = vld [vmem:[#allocation3 + $0x20] sm:$0xff]
    %v55 = vld [vmem:[#allocation3 + $0x28] sm:$0xff]
    %v56 = vld [vmem:[#allocation3 + $0x30] sm:$0xff]
    %v57 = vld [vmem:[#allocation3 + $0x38] sm:$0xff]
    %v58 = vld [vmem:[#allocation3 + $0x40] sm:$0xff]
    %v59 = vld [vmem:[#allocation3 + $0x48] sm:$0xff]
    %v60 = vld [vmem:[#allocation3 + $0x50] sm:$0xff]
    %v61 = vld [vmem:[#allocation3 + $0x58] sm:$0xff]
    %v62 = vld [vmem:[#allocation3 + $0x60] sm:$0xff]
    %v63 = vld [vmem:[#allocation3 + $0x68] sm:$0xff]
    %v64 = vld [vmem:[#allocation3 + $0x70] sm:$0xff]
    %v65 = vld [vmem:[#allocation3 + $0x78] sm:$0xff]
    %v66 = vld [vmem:[#allocation3 + $0x80] sm:$0xff]
    %v67 = vld [vmem:[#allocation3 + $0x88] sm:$0xff]
    %v68 = vld [vmem:[#allocation3 + $0x90] sm:$0xff]
    %v69 = vld [vmem:[#allocation3 + $0x98] sm:$0xff]
    %v70 = vld [vmem:[#allocation3 + $0xa0] sm:$0xff]
    %v71 = vld [vmem:[#allocation3 + $0xa8] sm:$0xff]
    %v72 = vld [vmem:[#allocation3 + $0xb0] sm:$0xff]
    %v73 = vld [vmem:[#allocation3 + $0xb8] sm:$0xff]
    %v74 = vld [vmem:[#allocation3 + $0xc0] sm:$0xff]
    %v75 = vld [vmem:[#allocation3 + $0xc8] sm:$0xff]
    %v76 = vld [vmem:[#allocation3 + $0xd0] sm:$0xff]
    %v77 = vld [vmem:[#allocation3 + $0xd8] sm:$0xff]
    %v78 = vld [vmem:[#allocation3 + $0xe0] sm:$0xff]
    %v79 = vld [vmem:[#allocation3 + $0xe8] sm:$0xff]
    %v80 = vld [vmem:[#allocation3 + $0xf0] sm:$0xff]
    %v81 = vld [vmem:[#allocation3 + $0xf8] sm:$0xff]
    %v82 = vld [vmem:[#allocation3 + $0x100] sm:$0xff]
    %v83 = vld [vmem:[#allocation3 + $0x108] sm:$0xff]
    %v84 = vld [vmem:[#allocation3 + $0x110] sm:$0xff]
    %v85 = vld [vmem:[#allocation3 + $0x118] sm:$0xff]
    %v86 = vld [vmem:[#allocation3 + $0x120] sm:$0xff]
    %v87 = vld [vmem:[#allocation3 + $0x128] sm:$0xff]
    %v88 = vld [vmem:[#allocation3 + $0x130] sm:$0xff]
    %v89 = vld [vmem:[#allocation3 + $0x138] sm:$0xff]
    %v90 = vld [vmem:[#allocation3 + $0x140] sm:$0xff]
    %v91 = vld [vmem:[#allocation3 + $0x148] sm:$0xff]
    %v92 = vld [vmem:[#allocation3 + $0x150] sm:$0xff]
    %v93 = vld [vmem:[#allocation3 + $0x158] sm:$0xff]
    %v94 = vld [vmem:[#allocation3 + $0x160] sm:$0xff]
    %v95 = vld [vmem:[#allocation3 + $0x168] sm:$0xff]
    %v96 = vld [vmem:[#allocation3 + $0x170] sm:$0xff]
    %v97 = vld [vmem:[#allocation3 + $0x178] sm:$0xff]
    %v98 = vld [vmem:[#allocation3 + $0x180] sm:$0xff]
    %v99 = vld [vmem:[#allocation3 + $0x188] sm:$0xff]
    %v100 = vld [vmem:[#allocation3 + $0x190] sm:$0xff]
    %v101 = vld [vmem:[#allocation3 + $0x198] sm:$0xff]
    %v102 = vld [vmem:[#allocation3 + $0x1a0] sm:$0xff]
    %v103 = vld [vmem:[#allocation3 + $0x1a8] sm:$0xff]
    %v104 = vld [vmem:[#allocation3 + $0x1b0] sm:$0xff]
    %v105 = vld [vmem:[#allocation3 + $0x1b8] sm:$0xff]
    %v106 = vld [vmem:[#allocation3 + $0x1c0] sm:$0xff]
    %v107 = vld [vmem:[#allocation3 + $0x1c8] sm:$0xff]
    %v108 = vld [vmem:[#allocation3 + $0x1d0] sm:$0xff]
    %v109 = vld [vmem:[#allocation3 + $0x1d8] sm:$0xff]
    %v110 = vld [vmem:[#allocation3 + $0x1e0] sm:$0xff]
    %v111 = vld [vmem:[#allocation3 + $0x1e8] sm:$0xff]
    %v112 = vld [vmem:[#allocation3 + $0x1f0] sm:$0xff]
    %v113 = vld [vmem:[#allocation3 + $0x1f8] sm:$0xff]
    %v114 = vld [vmem:[#allocation3 + $0x200] sm:$0xff]
    %v115 = vld [vmem:[#allocation3 + $0x208] sm:$0xff]
    %v116 = vld [vmem:[#allocation3 + $0x210] sm:$0xff]
    %v117 = vld [vmem:[#allocation3 + $0x218] sm:$0xff]
    %v118 = vld [vmem:[#allocation3 + $0x220] sm:$0xff]
    %v119 = vld [vmem:[#allocation3 + $0x228] sm:$0xff]
    %v120 = vld [vmem:[#allocation3 + $0x230] sm:$0xff]
    %v121 = vld [vmem:[#allocation3 + $0x238] sm:$0xff]
    %v122 = vld [vmem:[#allocation3 + $0x240] sm:$0xff]
    %v123 = vld [vmem:[#allocation3 + $0x248] sm:$0xff]
    %v124 = vld [vmem:[#allocation3 + $0x250] sm:$0xff]
    %v125 = vld [vmem:[#allocation3 + $0x258] sm:$0xff]
    %v126 = vld [vmem:[#allocation3 + $0x260] sm:$0xff]
    %v127 = vld [vmem:[#allocation3 + $0x268] sm:$0xff]
    %v128 = vld [vmem:[#allocation3 + $0x270] sm:$0xff]
    %v129 = vld [vmem:[#allocation3 + $0x278] sm:$0xff]
    %v130 = vld [vmem:[#allocation3 + $0x280] sm:$0xff]
    %v131 = vld [vmem:[#allocation3 + $0x288] sm:$0xff]
    %v132 = vld [vmem:[#allocation3 + $0x290] sm:$0xff]
    %v133 = vld [vmem:[#allocation3 + $0x298] sm:$0xff]
    %v134 = vld [vmem:[#allocation3 + $0x2a0] sm:$0xff]
    %v135 = vld [vmem:[#allocation3 + $0x2a8] sm:$0xff]
    %v136 = vld [vmem:[#allocation3 + $0x2b0] sm:$0xff]
    %v137 = vld [vmem:[#allocation3 + $0x2b8] sm:$0xff]
    %v138 = vld [vmem:[#allocation3 + $0x2c0] sm:$0xff]
    %v139 = vld [vmem:[#allocation3 + $0x2c8] sm:$0xff]
    %v140 = vld [vmem:[#allocation3 + $0x2d0] sm:$0xff]
    %v141 = vld [vmem:[#allocation3 + $0x2d8] sm:$0xff]
    %v142 = vld [vmem:[#allocation3 + $0x2e0] sm:$0xff]
    %v143 = vld [vmem:[#allocation3 + $0x2e8] sm:$0xff]
    %v144 = vld [vmem:[#allocation3 + $0x2f0] sm:$0xff]
    %v145 = vld [vmem:[#allocation3 + $0x2f8] sm:$0xff]
    %v242 = vunpack.c.l.b16 %v50
    %v243 = vunpack.c.h.b16 %v50
    %v244 = vunpack.c.l.b16 %v51
    %v245 = vunpack.c.h.b16 %v51
    %v246 = vunpack.c.l.b16 %v52
    %v247 = vunpack.c.h.b16 %v52
    %v248 = vunpack.c.l.b16 %v53
    %v249 = vunpack.c.h.b16 %v53
    %v250 = vunpack.c.l.b16 %v54
    %v251 = vunpack.c.h.b16 %v54
    %v252 = vunpack.c.l.b16 %v55
    %v253 = vunpack.c.h.b16 %v55
    %v254 = vunpack.c.l.b16 %v56
    %v255 = vunpack.c.h.b16 %v56
    %v256 = vunpack.c.l.b16 %v57
    %v257 = vunpack.c.h.b16 %v57
    %v258 = vunpack.c.l.b16 %v58
    %v259 = vunpack.c.h.b16 %v58
    %v260 = vunpack.c.l.b16 %v59
    %v261 = vunpack.c.h.b16 %v59
    %v262 = vunpack.c.l.b16 %v60
    %v263 = vunpack.c.h.b16 %v60
    %v264 = vunpack.c.l.b16 %v61
    %v265 = vunpack.c.h.b16 %v61
    %v266 = vunpack.c.l.b16 %v62
    %v267 = vunpack.c.h.b16 %v62
    %v268 = vunpack.c.l.b16 %v63
    %v269 = vunpack.c.h.b16 %v63
    %v270 = vunpack.c.l.b16 %v64
    %v271 = vunpack.c.h.b16 %v64
    %v272 = vunpack.c.l.b16 %v65
    %v273 = vunpack.c.h.b16 %v65
    %v274 = vunpack.c.l.b16 %v66
    %v275 = vunpack.c.h.b16 %v66
    %v276 = vunpack.c.l.b16 %v67
    %v277 = vunpack.c.h.b16 %v67
    %v278 = vunpack.c.l.b16 %v68
    %v279 = vunpack.c.h.b16 %v68
    %v280 = vunpack.c.l.b16 %v69
    %v281 = vunpack.c.h.b16 %v69
    %v282 = vunpack.c.l.b16 %v70
    %v283 = vunpack.c.h.b16 %v70
    %v284 = vunpack.c.l.b16 %v71
    %v285 = vunpack.c.h.b16 %v71
    %v286 = vunpack.c.l.b16 %v72
    %v287 = vunpack.c.h.b16 %v72
    %v288 = vunpack.c.l.b16 %v73
    %v289 = vunpack.c.h.b16 %v73
    %v290 = vunpack.c.l.b16 %v74
    %v291 = vunpack.c.h.b16 %v74
    %v292 = vunpack.c.l.b16 %v75
    %v293 = vunpack.c.h.b16 %v75
    %v294 = vunpack.c.l.b16 %v76
    %v295 = vunpack.c.h.b16 %v76
    %v296 = vunpack.c.l.b16 %v77
    %v297 = vunpack.c.h.b16 %v77
    %v298 = vunpack.c.l.b16 %v78
    %v299 = vunpack.c.h.b16 %v78
    %v300 = vunpack.c.l.b16 %v79
    %v301 = vunpack.c.h.b16 %v79
    %v302 = vunpack.c.l.b16 %v80
    %v303 = vunpack.c.h.b16 %v80
    %v304 = vunpack.c.l.b16 %v81
    %v305 = vunpack.c.h.b16 %v81
    %v306 = vunpack.c.l.b16 %v82
    %v307 = vunpack.c.h.b16 %v82
    %v308 = vunpack.c.l.b16 %v83
    %v309 = vunpack.c.h.b16 %v83
    %v310 = vunpack.c.l.b16 %v84
    %v311 = vunpack.c.h.b16 %v84
    %v312 = vunpack.c.l.b16 %v85
    %v313 = vunpack.c.h.b16 %v85
    %v314 = vunpack.c.l.b16 %v86
    %v315 = vunpack.c.h.b16 %v86
    %v316 = vunpack.c.l.b16 %v87
    %v317 = vunpack.c.h.b16 %v87
    %v318 = vunpack.c.l.b16 %v88
    %v319 = vunpack.c.h.b16 %v88
    %v320 = vunpack.c.l.b16 %v89
    %v321 = vunpack.c.h.b16 %v89
    %v322 = vunpack.c.l.b16 %v90
    %v323 = vunpack.c.h.b16 %v90
    %v324 = vunpack.c.l.b16 %v91
    %v325 = vunpack.c.h.b16 %v91
    %v326 = vunpack.c.l.b16 %v92
    %v327 = vunpack.c.h.b16 %v92
    %v328 = vunpack.c.l.b16 %v93
    %v329 = vunpack.c.h.b16 %v93
    %v330 = vunpack.c.l.b16 %v94
    %v331 = vunpack.c.h.b16 %v94
    %v332 = vunpack.c.l.b16 %v95
    %v333 = vunpack.c.h.b16 %v95
    %v334 = vunpack.c.l.b16 %v96
    %v335 = vunpack.c.h.b16 %v96
    %v336 = vunpack.c.l.b16 %v97
    %v337 = vunpack.c.h.b16 %v97
    %v338 = vunpack.c.l.b16 %v98
    %v339 = vunpack.c.h.b16 %v98
    %v340 = vunpack.c.l.b16 %v99
    %v341 = vunpack.c.h.b16 %v99
    %v342 = vunpack.c.l.b16 %v100
    %v343 = vunpack.c.h.b16 %v100
    %v344 = vunpack.c.l.b16 %v101
    %v345 = vunpack.c.h.b16 %v101
    %v346 = vunpack.c.l.b16 %v102
    %v347 = vunpack.c.h.b16 %v102
    %v348 = vunpack.c.l.b16 %v103
    %v349 = vunpack.c.h.b16 %v103
    %v350 = vunpack.c.l.b16 %v104
    %v351 = vunpack.c.h.b16 %v104
    %v352 = vunpack.c.l.b16 %v105
    %v353 = vunpack.c.h.b16 %v105
    %v354 = vunpack.c.l.b16 %v106
    %v355 = vunpack.c.h.b16 %v106
    %v356 = vunpack.c.l.b16 %v107
    %v357 = vunpack.c.h.b16 %v107
    %v358 = vunpack.c.l.b16 %v108
    %v359 = vunpack.c.h.b16 %v108
    %v360 = vunpack.c.l.b16 %v109
    %v361 = vunpack.c.h.b16 %v109
    %v362 = vunpack.c.l.b16 %v110
    %v363 = vunpack.c.h.b16 %v110
    %v364 = vunpack.c.l.b16 %v111
    %v365 = vunpack.c.h.b16 %v111
    %v366 = vunpack.c.l.b16 %v112
    %v367 = vunpack.c.h.b16 %v112
    %v368 = vunpack.c.l.b16 %v113
    %v369 = vunpack.c.h.b16 %v113
    %v370 = vunpack.c.l.b16 %v114
    %v371 = vunpack.c.h.b16 %v114
    %v372 = vunpack.c.l.b16 %v115
    %v373 = vunpack.c.h.b16 %v115
    %v374 = vunpack.c.l.b16 %v116
    %v375 = vunpack.c.h.b16 %v116
    %v376 = vunpack.c.l.b16 %v117
    %v377 = vunpack.c.h.b16 %v117
    %v378 = vunpack.c.l.b16 %v118
    %v379 = vunpack.c.h.b16 %v118
    %v380 = vunpack.c.l.b16 %v119
    %v381 = vunpack.c.h.b16 %v119
    %v382 = vunpack.c.l.b16 %v120
    %v383 = vunpack.c.h.b16 %v120
    %v384 = vunpack.c.l.b16 %v121
    %v385 = vunpack.c.h.b16 %v121
    %v386 = vunpack.c.l.b16 %v122
    %v387 = vunpack.c.h.b16 %v122
    %v388 = vunpack.c.l.b16 %v123
    %v389 = vunpack.c.h.b16 %v123
    %v390 = vunpack.c.l.b16 %v124
    %v391 = vunpack.c.h.b16 %v124
    %v392 = vunpack.c.l.b16 %v125
    %v393 = vunpack.c.h.b16 %v125
    %v394 = vunpack.c.l.b16 %v126
    %v395 = vunpack.c.h.b16 %v126
    %v396 = vunpack.c.l.b16 %v127
    %v397 = vunpack.c.h.b16 %v127
    %v398 = vunpack.c.l.b16 %v128
    %v399 = vunpack.c.h.b16 %v128
    %v400 = vunpack.c.l.b16 %v129
    %v401 = vunpack.c.h.b16 %v129
    %v402 = vunpack.c.l.b16 %v130
    %v403 = vunpack.c.h.b16 %v130
    %v404 = vunpack.c.l.b16 %v131
    %v405 = vunpack.c.h.b16 %v131
    %v406 = vunpack.c.l.b16 %v132
    %v407 = vunpack.c.h.b16 %v132
    %v408 = vunpack.c.l.b16 %v133
    %v409 = vunpack.c.h.b16 %v133
    %v410 = vunpack.c.l.b16 %v134
    %v411 = vunpack.c.h.b16 %v134
    %v412 = vunpack.c.l.b16 %v135
    %v413 = vunpack.c.h.b16 %v135
    %v414 = vunpack.c.l.b16 %v136
    %v415 = vunpack.c.h.b16 %v136
    %v416 = vunpack.c.l.b16 %v137
    %v417 = vunpack.c.h.b16 %v137
    %v418 = vunpack.c.l.b16 %v138
    %v419 = vunpack.c.h.b16 %v138
    %v420 = vunpack.c.l.b16 %v139
    %v421 = vunpack.c.h.b16 %v139
    %v422 = vunpack.c.l.b16 %v140
    %v423 = vunpack.c.h.b16 %v140
    %v424 = vunpack.c.l.b16 %v141
    %v425 = vunpack.c.h.b16 %v141
    %v426 = vunpack.c.l.b16 %v142
    %v427 = vunpack.c.h.b16 %v142
    %v428 = vunpack.c.l.b16 %v143
    %v429 = vunpack.c.h.b16 %v143
    %v430 = vunpack.c.l.b16 %v144
    %v431 = vunpack.c.h.b16 %v144
    %v432 = vunpack.c.l.b16 %v145
    %v433 = vunpack.c.h.b16 %v145
    %v434 = vpack.c.b16 %v244, %v242
    %v435 = vpack.c.b16 %v245, %v243
    %v436 = vpack.c.b16 %v248, %v246
    %v437 = vpack.c.b16 %v249, %v247
    %v438 = vpack.c.b16 %v252, %v250
    %v439 = vpack.c.b16 %v253, %v251
    %v440 = vpack.c.b16 %v256, %v254
    %v441 = vpack.c.b16 %v257, %v255
    %v442 = vpack.c.b16 %v260, %v258
    %v443 = vpack.c.b16 %v261, %v259
    %v444 = vpack.c.b16 %v264, %v262
    %v445 = vpack.c.b16 %v265, %v263
    %v446 = vpack.c.b16 %v268, %v266
    %v447 = vpack.c.b16 %v269, %v267
    %v448 = vpack.c.b16 %v272, %v270
    %v449 = vpack.c.b16 %v273, %v271
    %v450 = vpack.c.b16 %v276, %v274
    %v451 = vpack.c.b16 %v277, %v275
    %v452 = vpack.c.b16 %v280, %v278
    %v453 = vpack.c.b16 %v281, %v279
    %v454 = vpack.c.b16 %v284, %v282
    %v455 = vpack.c.b16 %v285, %v283
    %v456 = vpack.c.b16 %v288, %v286
    %v457 = vpack.c.b16 %v289, %v287
    %v458 = vpack.c.b16 %v292, %v290
    %v459 = vpack.c.b16 %v293, %v291
    %v460 = vpack.c.b16 %v296, %v294
    %v461 = vpack.c.b16 %v297, %v295
    %v462 = vpack.c.b16 %v300, %v298
    %v463 = vpack.c.b16 %v301, %v299
    %v464 = vpack.c.b16 %v304, %v302
    %v465 = vpack.c.b16 %v305, %v303
    %v466 = vpack.c.b16 %v308, %v306
    %v467 = vpack.c.b16 %v309, %v307
    %v468 = vpack.c.b16 %v312, %v310
    %v469 = vpack.c.b16 %v313, %v311
    %v470 = vpack.c.b16 %v316, %v314
    %v471 = vpack.c.b16 %v317, %v315
    %v472 = vpack.c.b16 %v320, %v318
    %v473 = vpack.c.b16 %v321, %v319
    %v474 = vpack.c.b16 %v324, %v322
    %v475 = vpack.c.b16 %v325, %v323
    %v476 = vpack.c.b16 %v328, %v326
    %v477 = vpack.c.b16 %v329, %v327
    %v478 = vpack.c.b16 %v332, %v330
    %v479 = vpack.c.b16 %v333, %v331
    %v480 = vpack.c.b16 %v336, %v334
    %v481 = vpack.c.b16 %v337, %v335
    %v482 = vpack.c.b16 %v340, %v338
    %v483 = vpack.c.b16 %v341, %v339
    %v484 = vpack.c.b16 %v344, %v342
    %v485 = vpack.c.b16 %v345, %v343
    %v486 = vpack.c.b16 %v348, %v346
    %v487 = vpack.c.b16 %v349, %v347
    %v488 = vpack.c.b16 %v352, %v350
    %v489 = vpack.c.b16 %v353, %v351
    %v490 = vpack.c.b16 %v356, %v354
    %v491 = vpack.c.b16 %v357, %v355
    %v492 = vpack.c.b16 %v360, %v358
    %v493 = vpack.c.b16 %v361, %v359
    %v494 = vpack.c.b16 %v364, %v362
    %v495 = vpack.c.b16 %v365, %v363
    %v496 = vpack.c.b16 %v368, %v366
    %v497 = vpack.c.b16 %v369, %v367
    %v498 = vpack.c.b16 %v372, %v370
    %v499 = vpack.c.b16 %v373, %v371
    %v500 = vpack.c.b16 %v376, %v374
    %v501 = vpack.c.b16 %v377, %v375
    %v502 = vpack.c.b16 %v380, %v378
    %v503 = vpack.c.b16 %v381, %v379
    %v504 = vpack.c.b16 %v384, %v382
    %v505 = vpack.c.b16 %v385, %v383
    %v506 = vpack.c.b16 %v388, %v386
    %v507 = vpack.c.b16 %v389, %v387
    %v508 = vpack.c.b16 %v392, %v390
    %v509 = vpack.c.b16 %v393, %v391
    %v510 = vpack.c.b16 %v396, %v394
    %v511 = vpack.c.b16 %v397, %v395
    %v512 = vpack.c.b16 %v400, %v398
    %v513 = vpack.c.b16 %v401, %v399
    %v514 = vpack.c.b16 %v404, %v402
    %v515 = vpack.c.b16 %v405, %v403
    %v516 = vpack.c.b16 %v408, %v406
    %v517 = vpack.c.b16 %v409, %v407
    %v518 = vpack.c.b16 %v412, %v410
    %v519 = vpack.c.b16 %v413, %v411
    %v520 = vpack.c.b16 %v416, %v414
    %v521 = vpack.c.b16 %v417, %v415
    %v522 = vpack.c.b16 %v420, %v418
    %v523 = vpack.c.b16 %v421, %v419
    %v524 = vpack.c.b16 %v424, %v422
    %v525 = vpack.c.b16 %v425, %v423
    %v526 = vpack.c.b16 %v428, %v426
    %v527 = vpack.c.b16 %v429, %v427
    %v528 = vpack.c.b16 %v432, %v430
    %v529 = vpack.c.b16 %v433, %v431
    %626 = vmatprep.subr.bf16.mxu0 %v449
    %627 = vmatpush1.bf16.msra.mxu0 %v448
    %628 = vmatprep.subr.bf16.mxu0 %v447
    %629 = vmatpush1.bf16.msra.mxu0 %v446
    %630 = vmatprep.subr.bf16.mxu0 %v445
    %631 = vmatpush1.bf16.msra.mxu0 %v444
    %632 = vmatprep.subr.bf16.mxu0 %v443
    %633 = vmatpush1.bf16.msra.mxu0 %v442
    %634 = vmatprep.subr.bf16.mxu0 %v441
    %635 = vmatpush1.bf16.msra.mxu0 %v440
    %636 = vmatprep.subr.bf16.mxu0 %v439
    %637 = vmatpush1.bf16.msra.mxu0 %v438
    %638 = vmatprep.subr.bf16.mxu0 %v437
    %639 = vmatpush1.bf16.msra.mxu0 %v436
    %640 = vmatprep.subr.bf16.mxu0 %v435
    %641 = vmatpush1.bf16.msra.mxu0 %v434
    %642 = vmatprep.subr.bf16.mxu0 %v465
    %643 = vmatpush2.bf16.msra.mxu0 %v464
    %644 = vmatprep.subr.bf16.mxu0 %v463
    %645 = vmatpush2.bf16.msra.mxu0 %v462
    %646 = vmatprep.subr.bf16.mxu0 %v461
    %647 = vmatpush2.bf16.msra.mxu0 %v460
    %648 = vmatprep.subr.bf16.mxu0 %v459
    %649 = vmatpush2.bf16.msra.mxu0 %v458
    %650 = vmatprep.subr.bf16.mxu0 %v457
    %651 = vmatpush2.bf16.msra.mxu0 %v456
    %652 = vmatprep.subr.bf16.mxu0 %v455
    %653 = vmatpush2.bf16.msra.mxu0 %v454
    %654 = vmatprep.subr.bf16.mxu0 %v453
    %655 = vmatpush2.bf16.msra.mxu0 %v452
    %656 = vmatprep.subr.bf16.mxu0 %v451
    %657 = vmatpush2.bf16.msra.mxu0 %v450
    %658 = vmatprep.mubr.bf16.mxu0 %v43
    %659 = vmatmul.mubr.bf16.gmra.mxu0 %v42
    %v660 = vpop.f32.mrf.mxu0
    %v661 = vadd.f32 0.0, %v660
    %v662 = vpop.f32.mrf.mxu0
    %v663 = vadd.f32 0.0, %v662
    %v664 = vpop.f32.mrf.mxu0
    %v665 = vpop.f32.mrf.mxu0
    %666 = vdwg.mxu0
    %667 = vmatprep.subr.bf16.mxu0 %v481
    %668 = vmatpush1.bf16.msra.mxu0 %v480
    %669 = vmatprep.subr.bf16.mxu0 %v479
    %670 = vmatpush1.bf16.msra.mxu0 %v478
    %671 = vmatprep.subr.bf16.mxu0 %v477
    %672 = vmatpush1.bf16.msra.mxu0 %v476
    %673 = vmatprep.subr.bf16.mxu0 %v475
    %674 = vmatpush1.bf16.msra.mxu0 %v474
    %675 = vmatprep.subr.bf16.mxu0 %v473
    %676 = vmatpush1.bf16.msra.mxu0 %v472
    %677 = vmatprep.subr.bf16.mxu0 %v471
    %678 = vmatpush1.bf16.msra.mxu0 %v470
    %679 = vmatprep.subr.bf16.mxu0 %v469
    %680 = vmatpush1.bf16.msra.mxu0 %v468
    %681 = vmatprep.subr.bf16.mxu0 %v467
    %682 = vmatpush1.bf16.msra.mxu0 %v466
    %683 = vmatprep.subr.bf16.mxu0 %v497
    %684 = vmatpush2.bf16.msra.mxu0 %v496
    %685 = vmatprep.subr.bf16.mxu0 %v495
    %686 = vmatpush2.bf16.msra.mxu0 %v494
    %687 = vmatprep.subr.bf16.mxu0 %v493
    %688 = vmatpush2.bf16.msra.mxu0 %v492
    %689 = vmatprep.subr.bf16.mxu0 %v491
    %690 = vmatpush2.bf16.msra.mxu0 %v490
    %691 = vmatprep.subr.bf16.mxu0 %v489
    %692 = vmatpush2.bf16.msra.mxu0 %v488
    %693 = vmatprep.subr.bf16.mxu0 %v487
    %694 = vmatpush2.bf16.msra.mxu0 %v486
    %695 = vmatprep.subr.bf16.mxu0 %v485
    %696 = vmatpush2.bf16.msra.mxu0 %v484
    %697 = vmatprep.subr.bf16.mxu0 %v483
    %698 = vmatpush2.bf16.msra.mxu0 %v482
    %699 = vmatprep.mubr.bf16.mxu0 %v45
    %700 = vmatmul.mubr.bf16.gmra.mxu0 %v44
    %v701 = vpop.f32.mrf.mxu0
    %v702 = vadd.f32 %v661, %v701
    %v703 = vpop.f32.mrf.mxu0
    %v704 = vadd.f32 %v663, %v703
    %v705 = vpop.f32.mrf.mxu0
    %v706 = vpop.f32.mrf.mxu0
    %707 = vdwg.mxu0
    %708 = vmatprep.subr.bf16.mxu0 %v513
    %709 = vmatpush1.bf16.msra.mxu0 %v512
    %710 = vmatprep.subr.bf16.mxu0 %v511
    %711 = vmatpush1.bf16.msra.mxu0 %v510
    %712 = vmatprep.subr.bf16.mxu0 %v509
    %713 = vmatpush1.bf16.msra.mxu0 %v508
    %714 = vmatprep.subr.bf16.mxu0 %v507
    %715 = vmatpush1.bf16.msra.mxu0 %v506
    %716 = vmatprep.subr.bf16.mxu0 %v505
    %717 = vmatpush1.bf16.msra.mxu0 %v504
    %718 = vmatprep.subr.bf16.mxu0 %v503
    %719 = vmatpush1.bf16.msra.mxu0 %v502
    %720 = vmatprep.subr.bf16.mxu0 %v501
    %721 = vmatpush1.bf16.msra.mxu0 %v500
    %722 = vmatprep.subr.bf16.mxu0 %v499
    %723 = vmatpush1.bf16.msra.mxu0 %v498
    %724 = vmatprep.subr.bf16.mxu0 %v529
    %725 = vmatpush2.bf16.msra.mxu0 %v528
    %726 = vmatprep.subr.bf16.mxu0 %v527
    %727 = vmatpush2.bf16.msra.mxu0 %v526
    %728 = vmatprep.subr.bf16.mxu0 %v525
    %729 = vmatpush2.bf16.msra.mxu0 %v524
    %730 = vmatprep.subr.bf16.mxu0 %v523
    %731 = vmatpush2.bf16.msra.mxu0 %v522
    %732 = vmatprep.subr.bf16.mxu0 %v521
    %733 = vmatpush2.bf16.msra.mxu0 %v520
    %734 = vmatprep.subr.bf16.mxu0 %v519
    %735 = vmatpush2.bf16.msra.mxu0 %v518
    %736 = vmatprep.subr.bf16.mxu0 %v517
    %737 = vmatpush2.bf16.msra.mxu0 %v516
    %738 = vmatprep.subr.bf16.mxu0 %v515
    %739 = vmatpush2.bf16.msra.mxu0 %v514
    %740 = vmatprep.mubr.bf16.mxu0 %v47
    %741 = vmatmul.mubr.bf16.gmra.mxu0 %v46
    %v742 = vpop.f32.mrf.mxu0
    %v743 = vadd.f32 %v702, %v742
    %v744 = vpop.f32.mrf.mxu0
    %v745 = vadd.f32 %v704, %v744
    %v746 = vpop.f32.mrf.mxu0
    %v747 = vpop.f32.mrf.mxu0
    %748 = vdwg.mxu0
    %v749 = vadd.f32 %v48, %v743
    %v750 = vadd.f32 %v49, %v745
    %751 = vst [vmem:[#allocation2] sm:$0xff] %v749
    %752 = vst [vmem:[#allocation2 + $0x8] sm:$0xff] %v750
    // Predicated region
    $region22: #{_fedta_forward_impl.1} parent=1 // pred_check
      %p753 = pneg %p30
    $region23: #{_fedta_forward_impl.1} parent=1 // pred_check_branch
      %755 = sbr.rel (%p753) target = $region25
    $region24: #{_fedta_forward_impl.1} parent=1 // pred_region
      %v756 = vld [vmem:[#allocation2] sm:$0xff]
      %v757 = vld [vmem:[#allocation2 + $0x8] sm:$0xff]
      %v758 = vmul.f32 %v756, %v756
      %v759 = vmul.f32 %v757, %v757
      %v760 = vadd.f32 %v758, %v759
      %761 = vadd.xlane.f32.xlu0 %v760
      %v762 = vpop.xlane.xlu0 %761
      %v763 = vmax.f32 %v762, 1e-24
      %v764 = vrsqrt.pop %v763
      %v765 = vmul.f32 %v756, %v764
      %v766 = vmul.f32 %v757, %v764
      %v767 = vpack.c.bf16 %v765, %v765
      %v768 = vpack.c.bf16 %v766, %v766
      %v769 = vld [vmem:[%s2] sm:$0xf]
      %v770 = vld [vmem:[%s2 + $0x4] sm:$0xf]
      %v771 = vld [vmem:[%s2 + $0x8] sm:$0xf]
      %v772 = vld [vmem:[%s2 + $0xc] sm:$0xf]
      %v773 = vld [vmem:[%s2 + $0x10] sm:$0xf]
      %v774 = vld [vmem:[%s2 + $0x14] sm:$0xf]
      %v775 = vld [vmem:[%s2 + $0x18] sm:$0xf]
      %v776 = vld [vmem:[%s2 + $0x1c] sm:$0xf]
      %v777 = vld [vmem:[%s2 + $0x20] sm:$0xf]
      %v778 = vld [vmem:[%s2 + $0x24] sm:$0xf]
      %v779 = vld [vmem:[%s2 + $0x28] sm:$0xf]
      %v780 = vld [vmem:[%s2 + $0x2c] sm:$0xf]
      %v781 = vld [vmem:[%s2 + $0x30] sm:$0xf]
      %v782 = vld [vmem:[%s2 + $0x34] sm:$0xf]
      %v783 = vld [vmem:[%s2 + $0x38] sm:$0xf]
      %v784 = vld [vmem:[%s2 + $0x3c] sm:$0xf]
      %v785 = vld [vmem:[%s2 + $0x40] sm:$0xf]
      %v786 = vld [vmem:[%s2 + $0x44] sm:$0xf]
      %v787 = vld [vmem:[%s2 + $0x48] sm:$0xf]
      %v788 = vld [vmem:[%s2 + $0x4c] sm:$0xf]
      %v789 = vld [vmem:[%s2 + $0x50] sm:$0xf]
      %v790 = vld [vmem:[%s2 + $0x54] sm:$0xf]
      %v791 = vld [vmem:[%s2 + $0x58] sm:$0xf]
      %v792 = vld [vmem:[%s2 + $0x5c] sm:$0xf]
      %v793 = vld [vmem:[%s2 + $0x60] sm:$0xf]
      %v794 = vld [vmem:[%s2 + $0x64] sm:$0xf]
      %v795 = vld [vmem:[%s2 + $0x68] sm:$0xf]
      %v796 = vld [vmem:[%s2 + $0x6c] sm:$0xf]
      %v797 = vld [vmem:[%s2 + $0x70] sm:$0xf]
      %v798 = vld [vmem:[%s2 + $0x74] sm:$0xf]
      %v799 = vld [vmem:[%s2 + $0x78] sm:$0xf]
      %v800 = vld [vmem:[%s2 + $0x7c] sm:$0xf]
      %v833 = vunpack.c.l.b16 %v769
      %v834 = vunpack.c.l.b16 %v770
      %v835 = vunpack.c.l.b16 %v771
      %v836 = vunpack.c.l.b16 %v772
      %v837 = vunpack.c.l.b16 %v773
      %v838 = vunpack.c.l.b16 %v774
      %v839 = vunpack.c.l.b16 %v775
      %v840 = vunpack.c.l.b16 %v776
      %v841 = vunpack.c.l.b16 %v777
      %v842 = vunpack.c.l.b16 %v778
      %v843 = vunpack.c.l.b16 %v779
      %v844 = vunpack.c.l.b16 %v780
      %v845 = vunpack.c.l.b16 %v781
      %v846 = vunpack.c.l.b16 %v782
      %v847 = vunpack.c.l.b16 %v783
      %v848 = vunpack.c.l.b16 %v784
      %v849 = vunpack.c.l.b16 %v785
      %v850 = vunpack.c.l.b16 %v786
      %v851 = vunpack.c.l.b16 %v787
      %v852 = vunpack.c.l.b16 %v788
      %v853 = vunpack.c.l.b16 %v789
      %v854 = vunpack.c.l.b16 %v790
      %v855 = vunpack.c.l.b16 %v791
      %v856 = vunpack.c.l.b16 %v792
      %v857 = vunpack.c.l.b16 %v793
      %v858 = vunpack.c.l.b16 %v794
      %v859 = vunpack.c.l.b16 %v795
      %v860 = vunpack.c.l.b16 %v796
      %v861 = vunpack.c.l.b16 %v797
      %v862 = vunpack.c.l.b16 %v798
      %v863 = vunpack.c.l.b16 %v799
      %v864 = vunpack.c.l.b16 %v800
      %v865 = vpack.c.b16 %v834, %v833
      %v866 = vpack.c.b16 %v836, %v835
      %v867 = vpack.c.b16 %v838, %v837
      %v868 = vpack.c.b16 %v840, %v839
      %v869 = vpack.c.b16 %v842, %v841
      %v870 = vpack.c.b16 %v844, %v843
      %v871 = vpack.c.b16 %v846, %v845
      %v872 = vpack.c.b16 %v848, %v847
      %v873 = vpack.c.b16 %v850, %v849
      %v874 = vpack.c.b16 %v852, %v851
      %v875 = vpack.c.b16 %v854, %v853
      %v876 = vpack.c.b16 %v856, %v855
      %v877 = vpack.c.b16 %v858, %v857
      %v878 = vpack.c.b16 %v860, %v859
      %v879 = vpack.c.b16 %v862, %v861
      %v880 = vpack.c.b16 %v864, %v863
      %897 = vmatprep.subr.bf16.mxu0 0
      %898 = vmatpush1.bf16.msra.mxu0 %v872
      %899 = vmatprep.subr.bf16.mxu0 0
      %900 = vmatpush1.bf16.msra.mxu0 %v871
      %901 = vmatprep.subr.bf16.mxu0 0
      %902 = vmatpush1.bf16.msra.mxu0 %v870
      %903 = vmatprep.subr.bf16.mxu0 0
      %904 = vmatpush1.bf16.msra.mxu0 %v869
      %905 = vmatprep.subr.bf16.mxu0 0
      %906 = vmatpush1.bf16.msra.mxu0 %v868
      %907 = vmatprep.subr.bf16.mxu0 0
      %908 = vmatpush1.bf16.msra.mxu0 %v867
      %909 = vmatprep.subr.bf16.mxu0 0
      %910 = vmatpush1.bf16.msra.mxu0 %v866
      %911 = vmatprep.subr.bf16.mxu0 0
      %912 = vmatpush1.bf16.msra.mxu0 %v865
      %913 = vmatprep.subr.bf16.mxu0 0
      %914 = vmatpush2.bf16.msra.mxu0 %v880
      %915 = vmatprep.subr.bf16.mxu0 0
      %916 = vmatpush2.bf16.msra.mxu0 %v879
      %917 = vmatprep.subr.bf16.mxu0 0
      %918 = vmatpush2.bf16.msra.mxu0 %v878
      %919 = vmatprep.subr.bf16.mxu0 0
      %920 = vmatpush2.bf16.msra.mxu0 %v877
      %921 = vmatprep.subr.bf16.mxu0 0
      %922 = vmatpush2.bf16.msra.mxu0 %v876
      %923 = vmatprep.subr.bf16.mxu0 0
      %924 = vmatpush2.bf16.msra.mxu0 %v875
      %925 = vmatprep.subr.bf16.mxu0 0
      %926 = vmatpush2.bf16.msra.mxu0 %v874
      %927 = vmatprep.subr.bf16.mxu0 0
      %928 = vmatpush2.bf16.msra.mxu0 %v873
      %929 = vmatprep.mubr.bf16.mxu0 %v768
      %930 = vmatmul.mubr.bf16.gmra.mxu0 %v767
      %v931 = vpop.f32.mrf.mxu0
      %v932 = vadd.f32 0.0, %v931
      %v933 = vpop.f32.mrf.mxu0
      %v934 = vpop.f32.mrf.mxu0
      %v935 = vpop.f32.mrf.mxu0
      %936 = vdwg.mxu0
      %937 = vst [vmem:[#allocation6] sm:$0xff] %v932
    $region25: #{_fedta_forward_impl.1} parent=1 // pred_fallthru
      _
    // Predicated region
    $region26: #{_fedta_forward_impl.1} parent=1 // pred_check
      _
    $region27: #{_fedta_forward_impl.1} parent=1 // pred_check_branch
      %939 = sbr.rel (0) target = $region29
    $region28: #{_fedta_forward_impl.1} parent=1 // pred_region
      %s941 = ssub.s32 128, 128
      %942 = vsyncadd [#allocation5], %s941
      %s944 = sshll.u32 [#allocation6], 4
      %s945 = int_to_ptr.vmem [resolvable:$true] %s944
      %947 = dma.vmem_to_hbm [thread:$0]  %s945, 128, %s3, [#allocation5]
    $region29: #{_fedta_forward_impl.1} parent=1 // pred_fallthru
      _
    // Predicated region
    $region30: #{_fedta_forward_impl.1} parent=1 // pred_check
      _
    $region31: #{_fedta_forward_impl.1} parent=1 // pred_check_branch
      %949 = sbr.rel (0) target = $region33
    $region32: #{_fedta_forward_impl.1} parent=1 // pred_region
      %950 = dma.done [#allocation5], 128
    $region33: #{_fedta_forward_impl.1} parent=1 // pred_fallthru
      _
    %951 = vsyncpa [#allocation4], 1
    %952 = vsyncpa [#allocation5], 1

</llo_original>
